<compile_context>
chip_gen: v6e
topology: v6e:2x2x1
jax: 0.10.0
libtpu: 0.0.40
codegen_flags: <defaults>
</compile_context>

<pallas_src>
import inspect
from functools import partial

import jax
import jax.numpy as jnp
from jax.experimental import pallas as pl
from jax.experimental.pallas import tpu as pltpu


# ---------------------------------------------------------------------------
# Pallas kernels: tiled y = (x @ W + b) * scale with f32 accumulation.
# ---------------------------------------------------------------------------
def _linear_kernel_acc(scale_ref, x_ref, w_ref, b_ref, o_ref, acc_ref):
    """Multi-step K reduction: accumulate in f32 scratch, finalize on last k."""
    k = pl.program_id(2)

    @pl.when(k == 0)
    def _init():
        acc_ref[...] = jnp.zeros_like(acc_ref)

    acc_ref[...] += jnp.dot(
        x_ref[...], w_ref[...], preferred_element_type=jnp.float32
    )

    @pl.when(k == pl.num_programs(2) - 1)
    def _finalize():
        # Bias add, scale and cast happen exactly once per output tile,
        # hidden under the last MXU drain.  Kept in f32 for accuracy.
        scale = scale_ref[0]
        y = (acc_ref[...] + b_ref[...].astype(jnp.float32)) * scale
        o_ref[...] = y.astype(o_ref.dtype)


def _linear_kernel_single(scale_ref, x_ref, w_ref, b_ref, o_ref):
    """Single-K-tile fast path: no scratch accumulator, fused epilogue."""
    y = jnp.dot(x_ref[...], w_ref[...], preferred_element_type=jnp.float32)
    y = (y + b_ref[...].astype(jnp.float32)) * scale_ref[0]
    o_ref[...] = y.astype(o_ref.dtype)


def _round_up(x, m):
    return ((x + m - 1) // m) * m


@partial(jax.jit, static_argnames=("tm", "tn", "tk"))
def pallas_linear(x, w, b, scale, *, tm=256, tn=256, tk=512):
    """y = (x @ w + b) * scale.

    x: [B, Din], w: [Din, Dout], b: [1, Dout], scale: [1] (f32) -> [B, Dout].
    Pads every dimension up to tile multiples (N, K to >=128 for lane-dense
    tiles) with zeros; the padding contributes nothing and is sliced away.
    """
    B, Din = x.shape
    Dout = w.shape[1]

    # Padded problem sizes (lane-dense N/K, sublane-aligned M).
    M = _round_up(max(B, 8), 8)
    K = _round_up(max(Din, 128), 128)
    N = _round_up(max(Dout, 128), 128)

    # Clamp tiles to the (padded) problem, then round the problem up to tiles.
    tm_, tk_, tn_ = min(tm, M), min(tk, K), min(tn, N)
    M, K, N = _round_up(M, tm_), _round_up(K, tk_), _round_up(N, tn_)

    xp = jnp.pad(x, ((0, M - B), (0, K - Din))) if (M != B or K != Din) else x
    wp = jnp.pad(w, ((0, K - Din), (0, N - Dout))) if (K != Din or N != Dout) else w
    bp = jnp.pad(b, ((0, 0), (0, N - Dout))) if N != Dout else b

    itemsize = jnp.dtype(x.dtype).itemsize
    cost = pl.CostEstimate(
        flops=2 * M * N * K,
        transcendentals=0,
        bytes_accessed=(M * K + K * N + N + M * N) * itemsize,
    )

    # Per-step VMEM footprint: double-buffered x/w/bias tiles + double-buffered
    # output tile + f32 accumulator.  Generous headroom, capped at 64 MiB so it
    # is valid on v7x (64 MiB physical VMEM) as well as v5e/v6e.
    vmem_est = (
        2 * (tm_ * tk_ + tk_ * tn_ + tn_) * itemsize
        + 2 * tm_ * tn_ * itemsize
        + tm_ * tn_ * 4
    )
    vmem_limit = int(min(max(4 * vmem_est, 16 * 1024 * 1024), 64 * 1024 * 1024))

    k_steps = K // tk_
    if k_steps == 1:
        kernel = _linear_kernel_single
        grid = (M // tm_, N // tn_)
        in_specs = [
            pl.BlockSpec(memory_space=pltpu.SMEM),           # scale [1]
            pl.BlockSpec((tm_, tk_), lambda i, j: (i, 0)),   # x tile
            pl.BlockSpec((tk_, tn_), lambda i, j: (0, j)),   # w tile
            pl.BlockSpec((1, tn_), lambda i, j: (0, j)),     # bias tile
        ]
        out_specs = pl.BlockSpec((tm_, tn_), lambda i, j: (i, j))
        scratch_shapes = []
        dim_sem = ("parallel", "parallel")
    else:
        kernel = _linear_kernel_acc
        grid = (M // tm_, N // tn_, k_steps)
        in_specs = [
            pl.BlockSpec(memory_space=pltpu.SMEM),              # scale [1]
            pl.BlockSpec((tm_, tk_), lambda i, j, k: (i, k)),   # x tile
            pl.BlockSpec((tk_, tn_), lambda i, j, k: (k, j)),   # w tile
            pl.BlockSpec((1, tn_), lambda i, j, k: (0, j)),     # bias tile
        ]
        out_specs = pl.BlockSpec((tm_, tn_), lambda i, j, k: (i, j))
        scratch_shapes = [pltpu.VMEM((tm_, tn_), jnp.float32)]
        dim_sem = ("parallel", "parallel", "arbitrary")

    out = pl.pallas_call(
        kernel,
        out_shape=jax.ShapeDtypeStruct((M, N), x.dtype),
        grid_spec=pltpu.PrefetchScalarGridSpec(
            num_scalar_prefetch=0,
            grid=grid,
            in_specs=in_specs,
            out_specs=out_specs,
            scratch_shapes=scratch_shapes,
        ),
        compiler_params=pltpu.CompilerParams(
            dimension_semantics=dim_sem,
            vmem_limit_bytes=vmem_limit,
        ),
        cost_estimate=cost,
    )(scale, xp, wp, bp)

    return out[:B, :Dout]


# ---------------------------------------------------------------------------
# Inner module: a simple Linear whose forward is the Pallas kernel above.
# ---------------------------------------------------------------------------
class PallasLinear:
    def __init__(self, in_features, out_features, dtype=jnp.float32):
        # Deterministic parameter init (synthetic, not a checkpoint load).
        # NOTE: for peak MXU throughput on v6e/v7x store params (and feed x)
        # as bf16; kept f32 here to preserve the 1e-5 reference tolerance.
        kw = jax.random.PRNGKey(42)
        kb = jax.random.PRNGKey(43)
        scale = 1.0 / jnp.sqrt(jnp.float32(in_features))
        self.weight = (
            jax.random.normal(kw, (in_features, out_features)) * scale
        ).astype(dtype)
        self.bias = (jax.random.normal(kb, (1, out_features)) * scale).astype(dtype)
        self.in_features = in_features
        self.out_features = out_features

    def forward(self, x, scale: float = 1.0):
        # `scale` is an accepted kwarg; anything else must be filtered by the
        # VariableKwargs wrapper before it reaches us.  The scale is fused
        # into the kernel epilogue (no separate elementwise pass over y).
        s = jnp.asarray([scale], dtype=jnp.float32)
        return pallas_linear(x, self.weight, self.bias, s)

    def __call__(self, *args, **kwargs):
        return self.forward(*args, **kwargs)


# ---------------------------------------------------------------------------
# VariableKwargs: port of the PyTorch wrapper's forward semantics.
# Signature inspection is cached at construction time (host-side fast path).
# ---------------------------------------------------------------------------
class VariableKwargs:
    """Wrapper allowing the wrapped module to take variable keyword arguments."""

    def __init__(self, module):
        object.__setattr__(self, "module", module)
        params = inspect.signature(module.forward).parameters
        object.__setattr__(
            self,
            "_has_var_keyword",
            any(p.kind == inspect.Parameter.VAR_KEYWORD for p in params.values()),
        )
        object.__setattr__(self, "_accepted_kwargs", frozenset(params.keys()))

    def __getattr__(self, name):
        if name == "module":
            raise AttributeError(name)
        return getattr(object.__getattribute__(self, "module"), name)

    def forward(self, *args, **kwargs):
        if self._has_var_keyword:
            module_kwargs = kwargs
        else:
            module_kwargs = {
                k: v for k, v in kwargs.items() if k in self._accepted_kwargs
            }
        return self.module(*args, **module_kwargs)

    def __call__(self, *args, **kwargs):
        return self.forward(*args, **kwargs)


if __name__ == "__main__":
    # ---- small demo shapes (matches the original module contract) ----------
    key = jax.random.PRNGKey(0)
    B, Din, Dout = 8, 32, 32
    x = jax.random.normal(key, (B, Din), dtype=jnp.float32)

    inner = PallasLinear(Din, Dout)
    wrapped = VariableKwargs(inner)

    # Extra kwargs ('mask', 'unused_flag') are filtered out by VariableKwargs;
    # 'scale' is forwarded because the inner forward accepts it.
    y = wrapped(x, scale=2.0, mask=None, unused_flag=123)
    y = jax.block_until_ready(y)

    y_ref = (x @ inner.weight + inner.bias) * 2.0
    assert y.shape == (B, Dout)
    assert jnp.allclose(y, y_ref, atol=1e-5, rtol=1e-5)

    # Attribute delegation check (matches torch wrapper's __getattr__).
    assert wrapped.out_features == Dout

    # ---- multi-tile sanity check: exercises the (M,N,K) grid + accumulator --
    B2, Din2, Dout2 = 512, 1024, 768
    x2 = jax.random.normal(jax.random.PRNGKey(1), (B2, Din2), dtype=jnp.float32)
    inner2 = PallasLinear(Din2, Dout2)
    wrapped2 = VariableKwargs(inner2)
    y2 = jax.block_until_ready(wrapped2(x2, scale=0.5, dropout_p=0.1))
    y2_ref = (
        jnp.dot(x2, inner2.weight, precision=jax.lax.Precision.HIGHEST)
        + inner2.bias
    ) * 0.5
    assert y2.shape == (B2, Dout2)
    assert jnp.allclose(y2, y2_ref, atol=1e-2, rtol=1e-2)

    print("KERNEL_OK")
</pallas_src>

<mosaic_0001>
module attributes {stable_mosaic.version = 11 : i64} {
  func.func @_linear_kernel_single(%arg0: i32, %arg1: i32, %arg2: memref<1xf32, #tpu.memory_space<smem>>, %arg3: memref<8x128xf32, #tpu.memory_space<vmem>>, %arg4: memref<128x128xf32, #tpu.memory_space<vmem>>, %arg5: memref<1x128xf32, #tpu.memory_space<vmem>>, %arg6: memref<8x128xf32, #tpu.memory_space<vmem>>) attributes {dimension_semantics = [#tpu.dimension_semantics<parallel>, #tpu.dimension_semantics<parallel>], iteration_bounds = array<i64: 1, 1>, scalar_prefetch = 0 : i64, scratch_operands = 0 : i64, tpu.core_type = #tpu.core_type<tc>, window_params = [{transform_indices = @transform_0, window_bounds = array<i64: 1>}, {transform_indices = @transform_1, window_bounds = array<i64: 8, 128>}, {transform_indices = @transform_2, window_bounds = array<i64: 128, 128>}, {transform_indices = @transform_3, window_bounds = array<i64: 1, 128>}, {transform_indices = @transform_4, window_bounds = array<i64: 8, 128>}]} {
    %c0 = arith.constant 0 : index
    %c0_0 = arith.constant 0 : index
    %0 = vector.load %arg3[%c0, %c0_0] : memref<8x128xf32, #tpu.memory_space<vmem>>, vector<8x128xf32>
    %c0_1 = arith.constant 0 : index
    %c0_2 = arith.constant 0 : index
    %1 = vector.load %arg4[%c0_1, %c0_2] : memref<128x128xf32, #tpu.memory_space<vmem>>, vector<128x128xf32>
    %cst = arith.constant dense<0.000000e+00> : vector<8x128xf32>
    %2 = tpu.matmul %0, %1, %cst {dimension_numbers = #tpu.dot_dimension_numbers<[1], [0], [0], [1], [0, 0, 1, 1], [], []>} : vector<8x128xf32>, vector<128x128xf32>, vector<8x128xf32> -> vector<8x128xf32>
    %c0_3 = arith.constant 0 : index
    %c0_4 = arith.constant 0 : index
    %3 = vector.load %arg5[%c0_3, %c0_4] : memref<1x128xf32, #tpu.memory_space<vmem>>, vector<1x128xf32>
    %4 = vector.broadcast %3 : vector<1x128xf32> to vector<8x128xf32>
    %5 = arith.addf %2, %4 : vector<8x128xf32>
    %c0_5 = arith.constant 0 : index
    %6 = memref.load %arg2[%c0_5] : memref<1xf32, #tpu.memory_space<smem>>
    %7 = vector.broadcast %6 : f32 to vector<8x128xf32>
    %8 = arith.mulf %5, %7 : vector<8x128xf32>
    %c0_6 = arith.constant 0 : index
    %c0_7 = arith.constant 0 : index
    %9 = vector.load %arg6[%c0_6, %c0_7] : memref<8x128xf32, #tpu.memory_space<vmem>>, vector<8x128xf32>
    tpu.vector_store %arg6[%c0_6, %c0_7], %8 {strides = array<i32>} : memref<8x128xf32, #tpu.memory_space<vmem>>, vector<8x128xf32>,
    return
  }
  func.func @transform_0(%arg0: i32, %arg1: i32) -> i32 {
    %c0_i32 = arith.constant 0 : i32
    %c0_i32_0 = arith.constant 0 : i32
    return %c0_i32 : i32
  }
  func.func @transform_1(%arg0: i32, %arg1: i32) -> (i32, i32) {
    %c0_i32 = arith.constant 0 : i32
    %c0_i32_0 = arith.constant 0 : i32
    return %arg0, %c0_i32 : i32, i32
  }
  func.func @transform_2(%arg0: i32, %arg1: i32) -> (i32, i32) {
    %c0_i32 = arith.constant 0 : i32
    %c0_i32_0 = arith.constant 0 : i32
    return %c0_i32, %arg1 : i32, i32
  }
  func.func @transform_3(%arg0: i32, %arg1: i32) -> (i32, i32) {
    %c0_i32 = arith.constant 0 : i32
    %c0_i32_0 = arith.constant 0 : i32
    return %c0_i32, %arg1 : i32, i32
  }
  func.func @transform_4(%arg0: i32, %arg1: i32) -> (i32, i32) {
    %c0_i32 = arith.constant 0 : i32
    return %arg0, %arg1 : i32, i32
  }
}

</mosaic_0001>

<llo_original>
// kernel: pallas_linear.1
$region0: #{pallas_linear.1}
  #allocation0 [shape = 'u32[]', space=smem, size = 0x4, offset = 0x4, fixed_abs, tag = 'smem constant byte address 0x4 - core index']
  #allocation1 [shape = 'u32[144,128]{1,0:T(1,128)}', space=vmem, size = 0x12000, scoped, tag = 'internal scratch']
  #allocation2 [shape = 'f32[1]{0:T(128)S(6)}', space=smem, size = 0x200, scoped, tag = 'scoped memory for pallas_linear.1']
  %s0 = inlined_call_operand.<no memory space> [shape: f32[1], index: 0, kind: input, shape index: {}]
  %s1 = inlined_call_operand.vmem [shape: f32[8,128], index: 1, kind: input, shape index: {}]
  %s2 = inlined_call_operand.vmem [shape: f32[128,128], index: 2, kind: input, shape index: {}]
  %s3 = inlined_call_operand.vmem [shape: f32[1,128], index: 3, kind: input, shape index: {}]
  %s4 = inlined_call_operand.hbm [shape: f32[8,128], index: 4, kind: output, shape index: {}]
  %s5 = sld [smem:[#allocation0]]
  $region26: #{pallas_linear.1} parent=0
    _
  %s7 = ssub.s32 1, %s5
  %s8 = scalar_select 0, %s7, %s5
  %9 = sst [smem:[#allocation2]] %s0
  $region1: #{pallas_linear.1} parent=0
    #allocation3 [shape = 'u8[4096]{0}', space=vmem, size = 0x1000, scoped, tag = 'output window, operand 0, single buffered']
    #allocation4 [shape = 's32[1]{0}', space=sflag, size = 0x4, scoped, tag = 'scoped memory for pallas_linear.1']
    %10 = vsyncpa [#allocation4], 0
    // Predicated region
    $region2: #{pallas_linear.1} parent=1 // pred_check
      _
    $region3: #{pallas_linear.1} parent=1 // pred_check_branch
      %12 = sbr.rel (0) target = $region5
    $region4: #{pallas_linear.1} parent=1 // pred_region
      _
    $region5: #{pallas_linear.1} parent=1 // pred_fallthru
      _
    // Predicated region
    $region6: #{pallas_linear.1} parent=1 // pred_check
      _
    $region7: #{pallas_linear.1} parent=1 // pred_check_branch
      %14 = sbr.rel (0) target = $region9
    $region8: #{pallas_linear.1} parent=1 // pred_region
      _
    $region9: #{pallas_linear.1} parent=1 // pred_fallthru
      _
    // Predicated region
    $region10: #{pallas_linear.1} parent=1 // pred_check
      _
    $region11: #{pallas_linear.1} parent=1 // pred_check_branch
      %16 = sbr.rel (0) target = $region13
    $region12: #{pallas_linear.1} parent=1 // pred_region
      _
    $region13: #{pallas_linear.1} parent=1 // pred_fallthru
      _
    // Predicated region
    $region14: #{pallas_linear.1} parent=1 // pred_check
      _
    $region15: #{pallas_linear.1} parent=1 // pred_check_branch
      %18 = sbr.rel (0) target = $region17
    $region16: #{pallas_linear.1} parent=1 // pred_region
      _
    $region17: #{pallas_linear.1} parent=1 // pred_fallthru
      _
    %v19 = vld [vmem:[%s1] sm:$0xff]
    %v20 = vld [vmem:[%s2] sm:$0xff]
    %v21 = vld [vmem:[%s2 + $0x8] sm:$0xff]
    %v22 = vld [vmem:[%s2 + $0x10] sm:$0xff]
    %v23 = vld [vmem:[%s2 + $0x18] sm:$0xff]
    %v24 = vld [vmem:[%s2 + $0x20] sm:$0xff]
    %v25 = vld [vmem:[%s2 + $0x28] sm:$0xff]
    %v26 = vld [vmem:[%s2 + $0x30] sm:$0xff]
    %v27 = vld [vmem:[%s2 + $0x38] sm:$0xff]
    %v28 = vld [vmem:[%s2 + $0x40] sm:$0xff]
    %v29 = vld [vmem:[%s2 + $0x48] sm:$0xff]
    %v30 = vld [vmem:[%s2 + $0x50] sm:$0xff]
    %v31 = vld [vmem:[%s2 + $0x58] sm:$0xff]
    %v32 = vld [vmem:[%s2 + $0x60] sm:$0xff]
    %v33 = vld [vmem:[%s2 + $0x68] sm:$0xff]
    %v34 = vld [vmem:[%s2 + $0x70] sm:$0xff]
    %v35 = vld [vmem:[%s2 + $0x78] sm:$0xff]
    %v36 = vld [vmem:[%s3] sm:$0x1]
    %v38 = vlaneseq
    %v39 = vshrl.u32 %v38, 7
    %v40 = vsub.s32 0, %v39
    %v41 = vrot.slane %v36, %v40
    %43 = vmatprep.subr.mxu0 0.0
    %44 = vmatpush1.msra.mxu0 %v35
    %45 = vmatprep.subr.mxu0 0.0
    %46 = vmatpush1.msra.mxu0 %v34
    %47 = vmatprep.subr.mxu0 0.0
    %48 = vmatpush1.msra.mxu0 %v33
    %49 = vmatprep.subr.mxu0 0.0
    %50 = vmatpush1.msra.mxu0 %v32
    %51 = vmatprep.subr.mxu0 0.0
    %52 = vmatpush1.msra.mxu0 %v31
    %53 = vmatprep.subr.mxu0 0.0
    %54 = vmatpush1.msra.mxu0 %v30
    %55 = vmatprep.subr.mxu0 0.0
    %56 = vmatpush1.msra.mxu0 %v29
    %57 = vmatprep.subr.mxu0 0.0
    %58 = vmatpush1.msra.mxu0 %v28
    %59 = vmatprep.subr.mxu0 0.0
    %60 = vmatpush1.msra.mxu0 %v27
    %61 = vmatprep.subr.mxu0 0.0
    %62 = vmatpush1.msra.mxu0 %v26
    %63 = vmatprep.subr.mxu0 0.0
    %64 = vmatpush1.msra.mxu0 %v25
    %65 = vmatprep.subr.mxu0 0.0
    %66 = vmatpush1.msra.mxu0 %v24
    %67 = vmatprep.subr.mxu0 0.0
    %68 = vmatpush1.msra.mxu0 %v23
    %69 = vmatprep.subr.mxu0 0.0
    %70 = vmatpush1.msra.mxu0 %v22
    %71 = vmatprep.subr.mxu0 0.0
    %72 = vmatpush1.msra.mxu0 %v21
    %73 = vmatprep.subr.mxu0 0.0
    %74 = vmatpush1.msra.mxu0 %v20
    %75 = vmatprep.subr.mxu0 0.0
    %76 = vmatpush2.msra.mxu0 0.0
    %77 = vmatprep.subr.mxu0 0.0
    %78 = vmatpush2.msra.mxu0 0.0
    %79 = vmatprep.subr.mxu0 0.0
    %80 = vmatpush2.msra.mxu0 0.0
    %81 = vmatprep.subr.mxu0 0.0
    %82 = vmatpush2.msra.mxu0 0.0
    %83 = vmatprep.subr.mxu0 0.0
    %84 = vmatpush2.msra.mxu0 0.0
    %85 = vmatprep.subr.mxu0 0.0
    %86 = vmatpush2.msra.mxu0 0.0
    %87 = vmatprep.subr.mxu0 0.0
    %88 = vmatpush2.msra.mxu0 0.0
    %89 = vmatprep.subr.mxu0 0.0
    %90 = vmatpush2.msra.mxu0 0.0
    %91 = vmatprep.subr.mxu0 0.0
    %92 = vmatpush2.msra.mxu0 0.0
    %93 = vmatprep.subr.mxu0 0.0
    %94 = vmatpush2.msra.mxu0 0.0
    %95 = vmatprep.subr.mxu0 0.0
    %96 = vmatpush2.msra.mxu0 0.0
    %97 = vmatprep.subr.mxu0 0.0
    %98 = vmatpush2.msra.mxu0 0.0
    %99 = vmatprep.subr.mxu0 0.0
    %100 = vmatpush2.msra.mxu0 0.0
    %101 = vmatprep.subr.mxu0 0.0
    %102 = vmatpush2.msra.mxu0 0.0
    %103 = vmatprep.subr.mxu0 0.0
    %104 = vmatpush2.msra.mxu0 0.0
    %105 = vmatprep.subr.mxu0 0.0
    %106 = vmatpush2.msra.mxu0 0.0
    %107 = vmatprep.mubr.f32.mxu0 0.0
    %108 = vmatmul.mubr.f32.gmra.mxu0 %v19
    %v109 = vpop.f32.mrf.mxu0
    %v110 = vadd.f32 %v41, %v109
    %v111 = vpop.f32.mrf.mxu0
    %112 = vdwg.mxu0
    %s113 = sld [smem:[#allocation2]]
    %v114 = vstv %s113
    %v115 = vmul.f32 %v110, %v114
    %116 = vst [vmem:[#allocation3] sm:$0xff] %v115
    // Predicated region
    $region18: #{pallas_linear.1} parent=1 // pred_check
      _
    $region19: #{pallas_linear.1} parent=1 // pred_check_branch
      %118 = sbr.rel (0) target = $region21
    $region20: #{pallas_linear.1} parent=1 // pred_region
      %s120 = ssub.s32 128, 128
      %121 = vsyncadd [#allocation4], %s120
      %s123 = sshll.u32 [#allocation3], 4
      %s124 = int_to_ptr.vmem [resolvable:$true] %s123
      %126 = dma.vmem_to_hbm [thread:$0]  %s124, 128, %s4, [#allocation4]
    $region21: #{pallas_linear.1} parent=1 // pred_fallthru
      _
    // Predicated region
    $region22: #{pallas_linear.1} parent=1 // pred_check
      _
    $region23: #{pallas_linear.1} parent=1 // pred_check_branch
      %128 = sbr.rel (0) target = $region25
    $region24: #{pallas_linear.1} parent=1 // pred_region
      %129 = dma.done [#allocation4], 128
    $region25: #{pallas_linear.1} parent=1 // pred_fallthru
      _
    %130 = vsyncpa [#allocation4], 1

</llo_original>
